<compile_context>
chip_gen: v5e
topology: v5e:2x2
jax: 0.10.0
libtpu: 0.0.40
codegen_flags: <defaults>
</compile_context>

<pallas_src>
import functools

import jax
import jax.numpy as jnp
from jax.experimental import pallas as pl
from jax.experimental.pallas import tpu as pltpu

# rgb_to_yuv(consts='uv') coefficients (only U and V are used by AverageLoss).
_UR, _UG, _UB = -0.14714119, -0.28886916, 0.43601035
_VR, _VG, _VB = 0.61497538, -0.51496512, -0.10001026

_LANES = 128
_SUBLANE_GRAN = 16          # multiple of 8 (f32) and 16 (bf16 sublane packing)
_MAX_ROW_TILE = 1024        # 3*1024*128*4 B = 1.5 MiB f32 per input buffer


def _avg_uv_loss_kernel(x_ref, y_ref, o_ref, acc_ref, *, rows, row_tile, squared):
    """Fused rgb->UV diff + L1/L2 contribution + per-batch running sum."""
    j = pl.program_id(1)

    @pl.when(j == 0)
    def _init():
        acc_ref[...] = jnp.zeros_like(acc_ref)

    # Per-channel diffs; cast inside the kernel so bf16 inputs stream at half
    # the HBM bytes.  Block shape: (1, 3, row_tile, 128).
    dr = x_ref[0, 0].astype(jnp.float32) - y_ref[0, 0].astype(jnp.float32)
    dg = x_ref[0, 1].astype(jnp.float32) - y_ref[0, 1].astype(jnp.float32)
    db = x_ref[0, 2].astype(jnp.float32) - y_ref[0, 2].astype(jnp.float32)
    du = _UR * dr + _UG * dg + _UB * db              # U(input) - U(target)
    dv = _VR * dr + _VG * dg + _VB * db              # V(input) - V(target)
    if squared:
        contrib = du * du + dv * dv
    else:
        contrib = jnp.abs(du) + jnp.abs(dv)

    # Ragged tail: the last row-block along j reads past the true row count;
    # mask those rows before they feed the accumulator (select, so undefined
    # tail data — even NaN/Inf — cannot propagate).
    if rows % row_tile != 0:
        local_row = jax.lax.broadcasted_iota(jnp.int32, (row_tile, _LANES), 0)
        valid = (j * row_tile + local_row) < rows
        contrib = jnp.where(valid, contrib, 0.0)

    # Vreg-shaped accumulator: per-step work is pure VPU vreg adds; the single
    # cross-lane/sublane reduce happens once per batch image in the epilogue.
    if row_tile % 8 == 0:
        acc_ref[...] += jnp.sum(contrib.reshape(-1, 8, _LANES), axis=0)
    else:  # tiny images only (rows < 8): accumulator is (1, 128)
        acc_ref[...] += jnp.sum(contrib, axis=0, keepdims=True)

    @pl.when(j == pl.num_programs(1) - 1)
    def _flush():
        o_ref[...] = jnp.sum(acc_ref[...]).reshape(1, 1, 1)


def _pick_row_tile(rows):
    """Largest tile <= _MAX_ROW_TILE; no divisibility requirement (tail masked)."""
    if rows >= _MAX_ROW_TILE:
        return _MAX_ROW_TILE
    if rows >= _SUBLANE_GRAN:
        return (rows // _SUBLANE_GRAN) * _SUBLANE_GRAN
    if rows >= 8:
        return (rows // 8) * 8
    return rows                      # block row dim == full array dim


def average_loss(inp, tgt, *, ds_f=None, criterion="l1"):
    """Pallas forward of AverageLoss(loss_f=L1Loss, reduction='mean', ds_f=ds_f)."""
    # TODO(synk): ds_f is an arbitrary user callable (e.g. nn.AvgPool2d); it is
    # applied as plain JAX here — only the UV conversion + mean-reduced loss is
    # fused into the Pallas kernel.
    if ds_f is not None:
        inp = ds_f(inp)
        tgt = ds_f(tgt)
    assert inp.shape == tgt.shape and inp.ndim == 4 and inp.shape[1] == 3, \
        "expected NCHW RGB tensors of identical shape"

    n, c, h, w = inp.shape
    p = h * w
    n_true = n * 2 * p                       # element count of the stacked (U, V) tensor

    # Lane-dense layout: (N, 3, rows, 128).
    x = inp.reshape(n, c, p)
    y = tgt.reshape(n, c, p)
    p128 = -(-p // _LANES) * _LANES
    if p128 != p:
        # TODO(synk): only hit when h*w % 128 != 0 (the lane-dense reshape
        # needs it); zero pad on both operands -> zero diff -> no contribution.
        pad = ((0, 0), (0, 0), (0, p128 - p))
        x = jnp.pad(x, pad)
        y = jnp.pad(y, pad)
    rows = p128 // _LANES
    x = x.reshape(n, c, rows, _LANES)
    y = y.reshape(n, c, rows, _LANES)

    row_tile = _pick_row_tile(rows)
    grid = (n, pl.cdiv(rows, row_tile))
    acc_rows = 8 if row_tile % 8 == 0 else 1

    kernel = functools.partial(
        _avg_uv_loss_kernel,
        rows=rows,
        row_tile=row_tile,
        squared=criterion.lower() in ("l2", "mse"),
    )

    in_spec = pl.BlockSpec((1, c, row_tile, _LANES), lambda i, j: (i, 0, j, 0))

    flops = 17 * n * p
    bytes_accessed = (x.size * x.dtype.itemsize
                      + y.size * y.dtype.itemsize + n * 4)

    partials = pl.pallas_call(
        kernel,
        out_shape=jax.ShapeDtypeStruct((n, 1, 1), jnp.float32),
        grid_spec=pltpu.PrefetchScalarGridSpec(
            num_scalar_prefetch=0,
            grid=grid,
            in_specs=[in_spec, in_spec],
            out_specs=pl.BlockSpec((1, 1, 1), lambda i, j: (i, 0, 0)),
            scratch_shapes=[pltpu.VMEM((acc_rows, _LANES), jnp.float32)],
        ),
        # Axis 0 (batch) carries no state across i -> "parallel" (shards the
        # stream across both v7x TensorCores; no-op on single-TC v5e/v6e).
        # Axis 1 carries the accumulator -> "arbitrary".
        compiler_params=pltpu.CompilerParams(
            dimension_semantics=("parallel", "arbitrary"),
            vmem_limit_bytes=32 * 1024 * 1024),
        cost_estimate=pl.CostEstimate(
            flops=flops, transcendentals=0, bytes_accessed=bytes_accessed),
    )(x, y)

    # Tiny per-batch partial-sum finish + mean normalization in the wrapper.
    return jnp.sum(partials) * jnp.float32(1.0 / n_true)


# ----------------------------- reference & demo ------------------------------

def _rgb_to_yuv_uv(img):
    r, g, b = img[:, 0:1], img[:, 1:2], img[:, 2:3]
    u = _UR * r + _UG * g + _UB * b
    v = _VR * r + _VG * g + _VB * b
    return jnp.concatenate([u, v], axis=1)


def _reference(inp, tgt, ds_f=None, criterion="l1"):
    if ds_f is not None:
        inp, tgt = ds_f(inp), ds_f(tgt)
    iu = _rgb_to_yuv_uv(inp.astype(jnp.float32))
    tu = _rgb_to_yuv_uv(tgt.astype(jnp.float32))
    d = iu - tu
    if criterion.lower() in ("l2", "mse"):
        return jnp.mean(d * d)
    return jnp.mean(jnp.abs(d))


def _avg_pool_2x2(x):
    """Stand-in for the usual ds_f = nn.AvgPool2d(2)."""
    n, c, h, w = x.shape
    return x.reshape(n, c, h // 2, 2, w // 2, 2).mean(axis=(3, 5))


if __name__ == "__main__":
    key = jax.random.PRNGKey(0)
    k1, k2 = jax.random.split(key)
    # NCHW RGB images: batch=2, channels=3, spatial=16x16, values in [0, 1].
    inp = jax.random.uniform(k1, (2, 3, 16, 16), dtype=jnp.float32)
    tgt = jax.random.uniform(k2, (2, 3, 16, 16), dtype=jnp.float32)

    ok = True
    cases = [
        dict(ds_f=_avg_pool_2x2, criterion="l1"),   # default AverageLoss config
        dict(ds_f=None, criterion="l1"),            # no downsampling
        dict(ds_f=None, criterion="l2"),            # MSE variant of loss_f
    ]
    for kw in cases:
        got = jax.block_until_ready(average_loss(inp, tgt, **kw))
        want = _reference(inp, tgt, **kw)
        if not jnp.allclose(got, want, atol=1e-5, rtol=1e-5):
            ok = False
            print(f"MISMATCH {kw}: {float(got)} vs {float(want)}")

    if ok:
        print("KERNEL_OK")
</pallas_src>

<mosaic_0001>
module attributes {stable_mosaic.version = 11 : i64} {
  func.func @_avg_uv_loss_kernel(%arg0: i32, %arg1: i32, %arg2: memref<1x3x1x128xf32, #tpu.memory_space<vmem>>, %arg3: memref<1x3x1x128xf32, #tpu.memory_space<vmem>>, %arg4: memref<1x1x1xf32, #tpu.memory_space<vmem>>, %arg5: memref<1x128xf32, #tpu.memory_space<vmem>>) attributes {dimension_semantics = [#tpu.dimension_semantics<parallel>, #tpu.dimension_semantics<arbitrary>], iteration_bounds = array<i64: 2, 1>, scalar_prefetch = 0 : i64, scratch_operands = 1 : i64, tpu.core_type = #tpu.core_type<tc>, window_params = [{transform_indices = @transform_0, window_bounds = array<i64: 1, 3, 1, 128>}, {transform_indices = @transform_1, window_bounds = array<i64: 1, 3, 1, 128>}, {transform_indices = @transform_2, window_bounds = array<i64: 1, 1, 1>}]} {
    %c0_i32 = arith.constant 0 : i32
    %0 = arith.cmpi eq, %arg1, %c0_i32 : i32
    %1 = arith.extui %0 : i1 to i32
    %c0_i32_0 = arith.constant 0 : i32
    %2 = arith.cmpi ne, %1, %c0_i32_0 : i32
    scf.if %2 {
      %cst_34 = arith.constant 0.000000e+00 : f32
      %45 = vector.broadcast %cst_34 : f32 to vector<1x128xf32>
      %c0_35 = arith.constant 0 : index
      %c0_36 = arith.constant 0 : index
      %46 = vector.load %arg5[%c0_35, %c0_36] : memref<1x128xf32, #tpu.memory_space<vmem>>, vector<1x128xf32>
      tpu.vector_store %arg5[%c0_35, %c0_36], %45 {strides = array<i32>} : memref<1x128xf32, #tpu.memory_space<vmem>>, vector<1x128xf32>,
    } else {
    }
    %c0 = arith.constant 0 : index
    %c0_1 = arith.constant 0 : index
    %c0_2 = arith.constant 0 : index
    %c0_3 = arith.constant 0 : index
    %3 = vector.load %arg2[%c0, %c0_1, %c0_2, %c0_3] : memref<1x3x1x128xf32, #tpu.memory_space<vmem>>, vector<1x1x1x128xf32>
    %4 = vector.shape_cast %3 : vector<1x1x1x128xf32> to vector<1x128xf32>
    %c0_4 = arith.constant 0 : index
    %c0_5 = arith.constant 0 : index
    %c0_6 = arith.constant 0 : index
    %c0_7 = arith.constant 0 : index
    %5 = vector.load %arg3[%c0_4, %c0_5, %c0_6, %c0_7] : memref<1x3x1x128xf32, #tpu.memory_space<vmem>>, vector<1x1x1x128xf32>
    %6 = vector.shape_cast %5 : vector<1x1x1x128xf32> to vector<1x128xf32>
    %7 = arith.subf %4, %6 : vector<1x128xf32>
    %c0_8 = arith.constant 0 : index
    %c1 = arith.constant 1 : index
    %c0_9 = arith.constant 0 : index
    %c0_10 = arith.constant 0 : index
    %8 = vector.load %arg2[%c0_8, %c1, %c0_9, %c0_10] : memref<1x3x1x128xf32, #tpu.memory_space<vmem>>, vector<1x1x1x128xf32>
    %9 = vector.shape_cast %8 : vector<1x1x1x128xf32> to vector<1x128xf32>
    %c0_11 = arith.constant 0 : index
    %c1_12 = arith.constant 1 : index
    %c0_13 = arith.constant 0 : index
    %c0_14 = arith.constant 0 : index
    %10 = vector.load %arg3[%c0_11, %c1_12, %c0_13, %c0_14] : memref<1x3x1x128xf32, #tpu.memory_space<vmem>>, vector<1x1x1x128xf32>
    %11 = vector.shape_cast %10 : vector<1x1x1x128xf32> to vector<1x128xf32>
    %12 = arith.subf %9, %11 : vector<1x128xf32>
    %c0_15 = arith.constant 0 : index
    %c2 = arith.constant 2 : index
    %c0_16 = arith.constant 0 : index
    %c0_17 = arith.constant 0 : index
    %13 = vector.load %arg2[%c0_15, %c2, %c0_16, %c0_17] : memref<1x3x1x128xf32, #tpu.memory_space<vmem>>, vector<1x1x1x128xf32>
    %14 = vector.shape_cast %13 : vector<1x1x1x128xf32> to vector<1x128xf32>
    %c0_18 = arith.constant 0 : index
    %c2_19 = arith.constant 2 : index
    %c0_20 = arith.constant 0 : index
    %c0_21 = arith.constant 0 : index
    %15 = vector.load %arg3[%c0_18, %c2_19, %c0_20, %c0_21] : memref<1x3x1x128xf32, #tpu.memory_space<vmem>>, vector<1x1x1x128xf32>
    %16 = vector.shape_cast %15 : vector<1x1x1x128xf32> to vector<1x128xf32>
    %17 = arith.subf %14, %16 : vector<1x128xf32>
    %cst = arith.constant -0.147141188 : f32
    %18 = vector.broadcast %cst : f32 to vector<1x128xf32>
    %19 = arith.mulf %18, %7 : vector<1x128xf32>
    %cst_22 = arith.constant -0.288869172 : f32
    %20 = vector.broadcast %cst_22 : f32 to vector<1x128xf32>
    %21 = arith.mulf %20, %12 : vector<1x128xf32>
    %22 = arith.addf %19, %21 : vector<1x128xf32>
    %cst_23 = arith.constant 0.436010361 : f32
    %23 = vector.broadcast %cst_23 : f32 to vector<1x128xf32>
    %24 = arith.mulf %23, %17 : vector<1x128xf32>
    %25 = arith.addf %22, %24 : vector<1x128xf32>
    %cst_24 = arith.constant 0.614975392 : f32
    %26 = vector.broadcast %cst_24 : f32 to vector<1x128xf32>
    %27 = arith.mulf %26, %7 : vector<1x128xf32>
    %cst_25 = arith.constant -0.514965117 : f32
    %28 = vector.broadcast %cst_25 : f32 to vector<1x128xf32>
    %29 = arith.mulf %28, %12 : vector<1x128xf32>
    %30 = arith.addf %27, %29 : vector<1x128xf32>
    %cst_26 = arith.constant -0.100010261 : f32
    %31 = vector.broadcast %cst_26 : f32 to vector<1x128xf32>
    %32 = arith.mulf %31, %17 : vector<1x128xf32>
    %33 = arith.addf %30, %32 : vector<1x128xf32>
    %34 = math.absf %25 : vector<1x128xf32>
    %35 = math.absf %33 : vector<1x128xf32>
    %36 = arith.addf %34, %35 : vector<1x128xf32>
    %c0_27 = arith.constant 0 : index
    %c0_28 = arith.constant 0 : index
    %37 = vector.load %arg5[%c0_27, %c0_28] : memref<1x128xf32, #tpu.memory_space<vmem>>, vector<1x128xf32>
    %cst_29 = arith.constant dense<0.000000e+00> : vector<128xf32>
    %38 = vector.multi_reduction <add>, %36, %cst_29 [0] : vector<1x128xf32> to vector<128xf32>
    %39 = vector.shape_cast %38 : vector<128xf32> to vector<1x128xf32>
    %40 = arith.addf %37, %39 : vector<1x128xf32>
    %c0_30 = arith.constant 0 : index
    %c0_31 = arith.constant 0 : index
    %41 = vector.load %arg5[%c0_30, %c0_31] : memref<1x128xf32, #tpu.memory_space<vmem>>, vector<1x128xf32>
    tpu.vector_store %arg5[%c0_30, %c0_31], %40 {strides = array<i32>} : memref<1x128xf32, #tpu.memory_space<vmem>>, vector<1x128xf32>,
    %c0_i32_32 = arith.constant 0 : i32
    %42 = arith.cmpi eq, %arg1, %c0_i32_32 : i32
    %43 = arith.extui %42 : i1 to i32
    %c0_i32_33 = arith.constant 0 : i32
    %44 = arith.cmpi ne, %43, %c0_i32_33 : i32
    scf.if %44 {
      %c0_34 = arith.constant 0 : index
      %c0_35 = arith.constant 0 : index
      %45 = vector.load %arg5[%c0_34, %c0_35] : memref<1x128xf32, #tpu.memory_space<vmem>>, vector<1x128xf32>
      %46 = vector.shape_cast %45 : vector<1x128xf32> to vector<1x1x128xf32>
      %cst_36 = arith.constant dense<0.000000e+00> : vector<1xf32>
      %47 = vector.multi_reduction <add>, %46, %cst_36 [1, 2] : vector<1x1x128xf32> to vector<1xf32>
      %48 = vector.shape_cast %47 : vector<1xf32> to vector<1x1x1xf32>
      %49 = vector.extract %48[0, 0, 0] : f32 from vector<1x1x1xf32>
      %50 = vector.broadcast %49 : f32 to vector<1x1x1xf32>
      %c0_37 = arith.constant 0 : index
      %c0_38 = arith.constant 0 : index
      %c0_39 = arith.constant 0 : index
      %51 = vector.load %arg4[%c0_37, %c0_38, %c0_39] : memref<1x1x1xf32, #tpu.memory_space<vmem>>, vector<1x1x1xf32>
      tpu.vector_store %arg4[%c0_37, %c0_38, %c0_39], %50 {strides = array<i32>} : memref<1x1x1xf32, #tpu.memory_space<vmem>>, vector<1x1x1xf32>,
    } else {
    }
    return
  }
  func.func @transform_0(%arg0: i32, %arg1: i32) -> (i32, i32, i32, i32) {
    %c0_i32 = arith.constant 0 : i32
    %c0_i32_0 = arith.constant 0 : i32
    %c0_i32_1 = arith.constant 0 : i32
    return %arg0, %c0_i32, %arg1, %c0_i32_0 : i32, i32, i32, i32
  }
  func.func @transform_1(%arg0: i32, %arg1: i32) -> (i32, i32, i32, i32) {
    %c0_i32 = arith.constant 0 : i32
    %c0_i32_0 = arith.constant 0 : i32
    %c0_i32_1 = arith.constant 0 : i32
    return %arg0, %c0_i32, %arg1, %c0_i32_0 : i32, i32, i32, i32
  }
  func.func @transform_2(%arg0: i32, %arg1: i32) -> (i32, i32, i32) {
    %c0_i32 = arith.constant 0 : i32
    %c0_i32_0 = arith.constant 0 : i32
    %c0_i32_1 = arith.constant 0 : i32
    return %arg0, %c0_i32, %c0_i32_0 : i32, i32, i32
  }
}

</mosaic_0001>

<llo_original>
// kernel: tpu_custom_call.1
$region0: #{tpu_custom_call.1}
  #allocation0 [shape = 'u32[]', space=smem, size = 0x4, offset = 0x4, fixed_abs, tag = 'smem constant byte address 0x4 - core index']
  #allocation1 [shape = 'u32[72,128]{1,0:T(1,128)}', space=vmem, size = 0x9000, scoped, tag = 'internal scratch']
  #allocation2 [shape = 'f32[1,128]{1,0:T(1,128)}', space=vmem, size = 0x200, scoped, tag = 'scratch operand']
  %s0 = inlined_call_operand.hbm [shape: f32[2,3,1,128], index: 0, kind: input, shape index: {}]
  %s1 = inlined_call_operand.hbm [shape: f32[2,3,1,128], index: 1, kind: input, shape index: {}]
  %s2 = inlined_call_operand.vmem [shape: f32[2,1,1], index: 2, kind: output, shape index: {}]
  %s3 = sld [smem:[#allocation0]]
  $region57: #{tpu_custom_call.1} parent=0
    _
  %s5 = ssub.s32 1, %s3
  %s6 = scalar_select 0, %s5, %s3
  $region1: #{tpu_custom_call.1} parent=0
    #allocation3 [shape = 'u8[3072]{0}', space=vmem, size = 0xc00, scoped, tag = 'input window, operand 0']
    #allocation4 [shape = 's32[2]{0}', space=sflag, size = 0x8, scoped, tag = 'scoped memory for tpu_custom_call.1']
    #allocation5 [shape = 'u8[3072]{0}', space=vmem, size = 0xc00, scoped, tag = 'input window, operand 1']
    #allocation6 [shape = 's32[2]{0}', space=sflag, size = 0x8, scoped, tag = 'scoped memory for tpu_custom_call.1']
    %7 = vsyncpa [#allocation4], 0
    %s8 = scalar_lea.sflag [#allocation4], 1
    %9 = vsyncpa %s8, 0
    %10 = vsyncpa [#allocation6], 0
    %s11 = scalar_lea.sflag [#allocation6], 1
    %12 = vsyncpa %s11, 0
    loop: start=0, step=1, limit=4
    $region2: #{tpu_custom_call.1} parent=1 // loop_pre_header
      _
    $region3: #{tpu_custom_call.1} parent=1 // loop_header
      %s14 = sphi 0, %s18
      %p15 = scmp.ge.s32.totalorder %s14, 4
      %s21 = sphi 0, %s33
      %s22 = sphi 0, %s29
      %s23 = sphi 0, %s21
      %s24 = sphi 0, %s22
      %s25 = sphi 0, %s23
      %s26 = sphi 0, %s24
      %s38 = sphi 0, %s40
      %s41 = sphi 0, %s38
      %s42 = sphi 0, %s41
      %s58 = sphi 0, %s42
      %s66 = sphi 0, %s68
      %s69 = sphi 0, %s66
      %s70 = sphi 0, %s69
      %s86 = sphi 0, %s70
      %s92 = sphi 0, %s94
      %s95 = sphi 0, %s92
      %s96 = sphi 0, %s95
      %s112 = sphi 0, %s96
    $region4: #{tpu_custom_call.1} parent=1 // loop_header_branch
      %17 = sbr.rel (%p15) target = $region8
    $region5: #{tpu_custom_call.1} parent=1 // loop_body
      %s19 = ssub.s32 %s14, 1
      %s20 = ssub.s32 %s14, 2
      %s27 = sadd.s32 1, %s22
      %p28 = scmp.ge.s32.totalorder %s27, 1
      %s29 = scalar_select %p28, 0, %s27
      %s30 = sadd.s32 1, %s21
      %s31 = scalar_select %p28, %s30, %s21
      %p32 = scmp.ge.s32.totalorder %s31, 2
      %s33 = scalar_select %p32, 0, %s31
      %s34 = ssub.s32 %s21, %s33
      %s35 = ssub.s32 %s22, %s29
      %s36 = sor.u32 %s34, %s35
      %p37 = scmp.eq.s32.totalorder %s36, 0
      %s39 = sadd.s32 %s38, 1
      %s40 = scalar_select %p37, %s38, %s39
      %p43 = pneg %p37
      %p44 = scmp.eq.s32.totalorder %s14, 1
      %p45 = por %p43, %p44
      %p46 = scmp.ne.s32.totalorder %s38, %s41
      %p47 = scmp.eq.s32.totalorder %s14, 0
      %p48 = por %p46, %p47
      %p49 = scmp.ne.s32.totalorder %s38, %s41
      %p50 = scmp.eq.s32.totalorder %s19, 1
      %p51 = por %p49, %p50
      %p52 = scmp.ne.s32.totalorder %s41, %s42
      %p53 = scmp.eq.s32.totalorder %s19, 0
      %p54 = por %p52, %p53
      %p55 = scmp.ne.s32.totalorder %s41, %s42
      %p56 = scmp.eq.s32.totalorder %s20, 1
      %p57 = por %p55, %p56
      %p59 = scmp.ne.s32.totalorder %s42, %s58
      %p60 = scmp.eq.s32.totalorder %s20, 0
      %p61 = por %p59, %p60
      %s62 = ssub.s32 %s21, %s33
      %s63 = ssub.s32 %s22, %s29
      %s64 = sor.u32 %s62, %s63
      %p65 = scmp.eq.s32.totalorder %s64, 0
      %s67 = sadd.s32 %s66, 1
      %s68 = scalar_select %p65, %s66, %s67
      %p71 = pneg %p65
      %p72 = scmp.eq.s32.totalorder %s14, 1
      %p73 = por %p71, %p72
      %p74 = scmp.ne.s32.totalorder %s66, %s69
      %p75 = scmp.eq.s32.totalorder %s14, 0
      %p76 = por %p74, %p75
      %p77 = scmp.ne.s32.totalorder %s66, %s69
      %p78 = scmp.eq.s32.totalorder %s19, 1
      %p79 = por %p77, %p78
      %p80 = scmp.ne.s32.totalorder %s69, %s70
      %p81 = scmp.eq.s32.totalorder %s19, 0
      %p82 = por %p80, %p81
      %p83 = scmp.ne.s32.totalorder %s69, %s70
      %p84 = scmp.eq.s32.totalorder %s20, 1
      %p85 = por %p83, %p84
      %p87 = scmp.ne.s32.totalorder %s70, %s86
      %p88 = scmp.eq.s32.totalorder %s20, 0
      %p89 = por %p87, %p88
      %s90 = ssub.s32 %s21, %s33
      %p91 = scmp.eq.s32.totalorder %s90, 0
      %s93 = sadd.s32 %s92, 1
      %s94 = scalar_select %p91, %s92, %s93
      %p97 = pneg %p91
      %p98 = scmp.eq.s32.totalorder %s14, 1
      %p99 = por %p97, %p98
      %p100 = scmp.ne.s32.totalorder %s92, %s95
      %p101 = scmp.eq.s32.totalorder %s14, 0
      %p102 = por %p100, %p101
      %p103 = scmp.ne.s32.totalorder %s92, %s95
      %p104 = scmp.eq.s32.totalorder %s19, 1
      %p105 = por %p103, %p104
      %p106 = scmp.ne.s32.totalorder %s95, %s96
      %p107 = scmp.eq.s32.totalorder %s19, 0
      %p108 = por %p106, %p107
      %p109 = scmp.ne.s32.totalorder %s95, %s96
      %p110 = scmp.eq.s32.totalorder %s20, 1
      %p111 = por %p109, %p110
      %p113 = scmp.ne.s32.totalorder %s96, %s112
      %p114 = scmp.eq.s32.totalorder %s20, 0
      %p115 = por %p113, %p114
      %p116 = scmp.le.s32.totalorder 1, %s14
      %p117 = scmp.lt.s32.totalorder %s14, 3
      %p118 = pnand %p116, %p117
      %p119 = pneg %p118
      // Predicated region
      $region9: #{tpu_custom_call.1} parent=5 // pred_check
        _
      $region10: #{tpu_custom_call.1} parent=5 // pred_check_branch
        %121 = sbr.rel (%p118) target = $region12
      $region11: #{tpu_custom_call.1} parent=5 // pred_region
        %s122 = ssub.s32 %s14, 1
      $region12: #{tpu_custom_call.1} parent=5 // pred_fallthru
        _
      %p123 = scmp.lt.s32.totalorder %s14, 2
      // Predicated region
      $region13: #{tpu_custom_call.1} parent=5 // pred_check
        %p124 = pneg %p123
      $region14: #{tpu_custom_call.1} parent=5 // pred_check_branch
        %126 = sbr.rel (%p124) target = $region16
      $region15: #{tpu_custom_call.1} parent=5 // pred_region
        // Predicated region
        $region17: #{tpu_custom_call.1} parent=15 // pred_check
          %p127 = pneg %p48
        $region18: #{tpu_custom_call.1} parent=15 // pred_check_branch
          %129 = sbr.rel (%p127) target = $region20
        $region19: #{tpu_custom_call.1} parent=15 // pred_region
          %s130 = sand.u32 %s38, 1
          %s131 = scalar_lea.sflag [#allocation4], %s130
          %s132 = sand.u32 %s38, 1
          %s133 = smul.addr %s132, 3
          %s134 = scalar_lea.vmem [#allocation3], %s133
          %136 = vsyncadd %s131, 0
          %s137 = smul.addr %s21, 3
          %s138 = sadd.s32 %s22, %s137
          %s139 = scalar_lea.hbm %s0, %s138
          %s140 = sshll.u32 %s139, 4
          %s141 = int_to_ptr.hbm [resolvable:$true] %s140
          %s142 = sshll.u32 %s134, 4
          %s143 = int_to_ptr.vmem [resolvable:$true] %s142
          %148 = dma.hbm_to_vmem [thread:$0]  %s141, 48, %s143, %s131, 16, 16, 1
        $region20: #{tpu_custom_call.1} parent=15 // pred_fallthru
          _
        // Predicated region
        $region21: #{tpu_custom_call.1} parent=15 // pred_check
          %p149 = pneg %p76
        $region22: #{tpu_custom_call.1} parent=15 // pred_check_branch
          %151 = sbr.rel (%p149) target = $region24
        $region23: #{tpu_custom_call.1} parent=15 // pred_region
          %s152 = sand.u32 %s66, 1
          %s153 = scalar_lea.sflag [#allocation6], %s152
          %s154 = sand.u32 %s66, 1
          %s155 = smul.addr %s154, 3
          %s156 = scalar_lea.vmem [#allocation5], %s155
          %158 = vsyncadd %s153, 0
          %s159 = smul.addr %s21, 3
          %s160 = sadd.s32 %s22, %s159
          %s161 = scalar_lea.hbm %s1, %s160
          %s162 = sshll.u32 %s161, 4
          %s163 = int_to_ptr.hbm [resolvable:$true] %s162
          %s164 = sshll.u32 %s156, 4
          %s165 = int_to_ptr.vmem [resolvable:$true] %s164
          %170 = dma.hbm_to_vmem [thread:$0]  %s163, 48, %s165, %s153, 16, 16, 1
        $region24: #{tpu_custom_call.1} parent=15 // pred_fallthru
          _
      $region16: #{tpu_custom_call.1} parent=5 // pred_fallthru
        _
      %p171 = scmp.le.s32.totalorder 1, %s14
      %p172 = scmp.lt.s32.totalorder %s14, 3
      %p173 = pnand %p171, %p172
      %p174 = pneg %p173
      // Predicated region
      $region25: #{tpu_custom_call.1} parent=5 // pred_check
        _
      $region26: #{tpu_custom_call.1} parent=5 // pred_check_branch
        %176 = sbr.rel (%p173) target = $region28
      $region27: #{tpu_custom_call.1} parent=5 // pred_region
        %s177 = ssub.s32 %s14, 1
        %s178 = sand.u32 %s41, 1
        %s179 = scalar_lea.sflag [#allocation4], %s178
        %s180 = sand.u32 %s41, 1
        %s181 = smul.addr %s180, 3
        %s182 = scalar_lea.vmem [#allocation3], %s181
        // Predicated region
        $region29: #{tpu_custom_call.1} parent=27 // pred_check
          %p183 = pneg %p54
        $region30: #{tpu_custom_call.1} parent=27 // pred_check_branch
          %185 = sbr.rel (%p183) target = $region32
        $region31: #{tpu_custom_call.1} parent=27 // pred_region
          %187 = dma.done %s179, 48
        $region32: #{tpu_custom_call.1} parent=27 // pred_fallthru
          _
        %s188 = sand.u32 %s69, 1
        %s189 = scalar_lea.sflag [#allocation6], %s188
        %s190 = sand.u32 %s69, 1
        %s191 = smul.addr %s190, 3
        %s192 = scalar_lea.vmem [#allocation5], %s191
        // Predicated region
        $region33: #{tpu_custom_call.1} parent=27 // pred_check
          %p193 = pneg %p82
        $region34: #{tpu_custom_call.1} parent=27 // pred_check_branch
          %195 = sbr.rel (%p193) target = $region36
        $region35: #{tpu_custom_call.1} parent=27 // pred_region
          %197 = dma.done %s189, 48
        $region36: #{tpu_custom_call.1} parent=27 // pred_fallthru
          _
        %s198 = sand.u32 %s41, 1
        %s199 = scalar_lea.sflag [#allocation4], %s198
        %s200 = sand.u32 %s41, 1
        %s201 = smul.addr %s200, 3
        %s202 = scalar_lea.vmem [#allocation3], %s201
        %p203 = pneg %p54
        %p204 = pneg %p51
        %s205 = sand.u32 %s69, 1
        %s206 = scalar_lea.sflag [#allocation6], %s205
        %s207 = sand.u32 %s69, 1
        %s208 = smul.addr %s207, 3
        %s209 = scalar_lea.vmem [#allocation5], %s208
        %p210 = pneg %p82
        %p211 = pneg %p79
        %p212 = pneg %p108
        %p213 = pneg %p105
        %p214 = scmp.lt.s32.totalorder %s23, 1
        %s215 = scalar_select %p214, %s23, 1
        %s216 = scalar_lea.vmem %s2, %s215
        %p217 = scmp.lt.s32.totalorder %s23, 1
        %s218 = scalar_select %p217, %s23, 1
        %s219 = scalar_lea.vmem %s2, %s218
        %p220 = scmp.eq.s32.totalorder %s24, 0
        // Predicated region
        $region37: #{tpu_custom_call.1} parent=27 // pred_check
          %p221 = pneg %p220
        $region38: #{tpu_custom_call.1} parent=27 // pred_check_branch
          %223 = sbr.rel (%p221) target = $region40
        $region39: #{tpu_custom_call.1} parent=27 // pred_region
          %224 = vst [vmem:[#allocation2] sm:$0x1] 0.0
        $region40: #{tpu_custom_call.1} parent=27 // pred_fallthru
          _
        %v225 = vld [vmem:[%s182] sm:$0x1]
        %v226 = vld [vmem:[%s192] sm:$0x1]
        %v227 = vsub.f32 %v225, %v226
        %s228 = scalar_lea.vmem %s182, 1 [#allocation3]
        %v229 = vld [vmem:[%s228] sm:$0x1]
        %s230 = scalar_lea.vmem %s192, 1 [#allocation5]
        %v231 = vld [vmem:[%s230] sm:$0x1]
        %v232 = vsub.f32 %v229, %v231
        %s233 = scalar_lea.vmem %s182, 2 [#allocation3]
        %v234 = vld [vmem:[%s233] sm:$0x1]
        %s235 = scalar_lea.vmem %s192, 2 [#allocation5]
        %v236 = vld [vmem:[%s235] sm:$0x1]
        %v237 = vsub.f32 %v234, %v236
        %v238 = vmul.f32 %v227, -0.14714119
        %v239 = vmul.f32 %v232, -0.28886917
        %v240 = vadd.f32 %v238, %v239
        %v241 = vmul.f32 %v237, 0.43601036
        %v242 = vadd.f32 %v240, %v241
        %v243 = vmul.f32 %v227, 0.6149754
        %v244 = vmul.f32 %v232, -0.5149651
        %v245 = vadd.f32 %v243, %v244
        %v246 = vmul.f32 %v237, -0.10001026
        %v247 = vadd.f32 %v245, %v246
        %v248 = vand.u32 2147483647, %v242
        %v249 = vand.u32 2147483647, %v247
        %v250 = vadd.f32 %v248, %v249
        %v251 = vld [vmem:[#allocation2] sm:$0x1]
        %v252 = vadd.f32 %v250, 0.0
        %v253 = vadd.f32 %v251, %v252
        %254 = vst [vmem:[#allocation2] sm:$0x1] %v253
        // Predicated region
        $region41: #{tpu_custom_call.1} parent=27 // pred_check
          %p255 = pneg %p220
        $region42: #{tpu_custom_call.1} parent=27 // pred_check_branch
          %257 = sbr.rel (%p255) target = $region44
        $region43: #{tpu_custom_call.1} parent=27 // pred_region
          %v258 = vld [vmem:[#allocation2] sm:$0x1]
          %vm259 = vcmask 1040384
          %v260 = vsel %vm259, %v258, 0.0
          %261 = vadd.xlane.f32.xlu0 %v260
          %v262 = vpop.xlane.xlu0 %261
          %v263 = vrot.slane %v262, 4
          %v264 = vadd.f32 %v262, %v263
          %v265 = vrot.slane %v264, 2
          %v266 = vadd.f32 %v264, %v265
          %v267 = vrot.slane %v266, 1
          %v268 = vadd.f32 %v266, %v267
          %s269 = vtos %v268
          %v270 = vstv %s269
          %vm271 = vcmask 0
          %272 = vst.msk [vmem:[%s219] sm:$0x1] %vm271, %v270
        $region44: #{tpu_custom_call.1} parent=27 // pred_fallthru
          _
        %p273 = scmp.lt.s32.totalorder %s23, 1
        %s274 = scalar_select %p273, %s23, 1
        %s275 = scalar_lea.vmem %s2, %s274
        // Predicated region
        $region45: #{tpu_custom_call.1} parent=27 // pred_check
          %p276 = pneg %p105
        $region46: #{tpu_custom_call.1} parent=27 // pred_check_branch
          %278 = sbr.rel (%p276) target = $region48
        $region47: #{tpu_custom_call.1} parent=27 // pred_region
          _
        $region48: #{tpu_custom_call.1} parent=27 // pred_fallthru
          _
      $region28: #{tpu_custom_call.1} parent=5 // pred_fallthru
        _
      %p279 = scmp.le.s32.totalorder 2, %s14
      // Predicated region
      $region49: #{tpu_custom_call.1} parent=5 // pred_check
        %p280 = pneg %p279
      $region50: #{tpu_custom_call.1} parent=5 // pred_check_branch
        %282 = sbr.rel (%p280) target = $region52
      $region51: #{tpu_custom_call.1} parent=5 // pred_region
        %s283 = ssub.s32 %s14, 2
        // Predicated region
        $region53: #{tpu_custom_call.1} parent=51 // pred_check
          %p284 = pneg %p111
        $region54: #{tpu_custom_call.1} parent=51 // pred_check_branch
          %286 = sbr.rel (%p284) target = $region56
        $region55: #{tpu_custom_call.1} parent=51 // pred_region
          %p287 = scmp.lt.s32.totalorder %s25, 1
          %s288 = scalar_select %p287, %s25, 1
          %s289 = scalar_lea.vmem %s2, %s288
        $region56: #{tpu_custom_call.1} parent=51 // pred_fallthru
          _
      $region52: #{tpu_custom_call.1} parent=5 // pred_fallthru
        _
    $region6: #{tpu_custom_call.1} parent=1 // loop_footer
      %s18 = sadd.s32 1, %s14
    $region7: #{tpu_custom_call.1} parent=1 // loop_footer_branch
      %13 = sbr.rel target = $region3
    $region8: #{tpu_custom_call.1} parent=1 // loop_exit
      _
    %290 = vsyncpa [#allocation4], 1
    %s291 = scalar_lea.sflag [#allocation4], 1
    %292 = vsyncpa %s291, 1
    %293 = vsyncpa [#allocation6], 1
    %s294 = scalar_lea.sflag [#allocation6], 1
    %295 = vsyncpa %s294, 1

</llo_original>
